<compile_context>
chip_gen: v6e
topology: v6e:2x2x1
jax: 0.10.0
libtpu: 0.0.40
codegen_flags: <defaults>
</compile_context>

<pallas_src>
import functools

import jax
import jax.numpy as jnp
from jax.experimental import pallas as pl
from jax.experimental.pallas import tpu as pltpu


def _round_up(x, m):
    return ((x + m - 1) // m) * m


def _pick_tile(dim, candidates):
    for c in candidates:
        if dim % c == 0:
            return c
    return dim


# ----------------------------------------------------------------------------
# Kernel 1: SoA vertex transform + pinhole projection
# ----------------------------------------------------------------------------
def vertex_kernel(params_ref, mesh_ref, out_ref):
    # params_ref: (B, 16) SMEM : [R00..R22, t0,t1,t2, fx,fy,cx,cy]
    # mesh_ref  : (1, 3, Vp) VMEM, rows = x, y, z (vertices on the lane axis)
    # out_ref   : (1, 3, Vp) VMEM, rows = px, py, z_cam
    b = pl.program_id(0)

    mx = mesh_ref[0, 0:1, :]
    my = mesh_ref[0, 1:2, :]
    mz = mesh_ref[0, 2:3, :]

    r00 = params_ref[b, 0]; r01 = params_ref[b, 1]; r02 = params_ref[b, 2]
    r10 = params_ref[b, 3]; r11 = params_ref[b, 4]; r12 = params_ref[b, 5]
    r20 = params_ref[b, 6]; r21 = params_ref[b, 7]; r22 = params_ref[b, 8]
    t0 = params_ref[b, 9]; t1 = params_ref[b, 10]; t2 = params_ref[b, 11]
    fx = params_ref[b, 12]; fy = params_ref[b, 13]
    cx = params_ref[b, 14]; cy = params_ref[b, 15]

    # v = R @ m + t, as three lane-dense FMAs (K=3 -> keep off the MXU).
    x = r00 * mx + r01 * my + r02 * mz + t0
    y = r10 * mx + r11 * my + r12 * mz + t1
    z = r20 * mx + r21 * my + r22 * mz + t2

    z_safe = jnp.where(jnp.abs(z) < 1e-8, 1e-8, z)
    inv_z = pl.reciprocal(z_safe)   # approx=True possible if 0.5px jitter is OK

    out_ref[0, 0:1, :] = fx * x * inv_z + cx
    out_ref[0, 1:2, :] = fy * y * inv_z + cy
    out_ref[0, 2:3, :] = z


def vertex_transform(mesh, R, t, cam):
    # mesh (B, V, 3) -> projected SoA (B, 3, V): rows = [px, py, z_cam]
    B, V, _ = mesh.shape
    Vp = _round_up(V, 128)
    mesh_t = jnp.swapaxes(mesh, 1, 2).astype(jnp.float32)          # (B, 3, V)
    if Vp != V:
        mesh_t = jnp.pad(mesh_t, ((0, 0), (0, 0), (0, Vp - V)))
    params = jnp.concatenate(
        [R.reshape(B, 9), t.reshape(B, 3), cam.reshape(B, 4)], axis=-1
    ).astype(jnp.float32)                                          # (B, 16)

    proj = pl.pallas_call(
        vertex_kernel,
        out_shape=jax.ShapeDtypeStruct((B, 3, Vp), jnp.float32),
        grid=(B,),
        in_specs=[
            pl.BlockSpec(memory_space=pltpu.MemorySpace.SMEM),     # camera scalars
            pl.BlockSpec((1, 3, Vp), lambda b: (b, 0, 0)),         # mesh (VMEM)
        ],
        out_specs=pl.BlockSpec((1, 3, Vp), lambda b: (b, 0, 0)),
        compiler_params=pltpu.CompilerParams(dimension_semantics=("parallel",)),
    )(params, mesh_t)
    return proj[:, :, :V]


# ----------------------------------------------------------------------------
# XLA glue: per-face edge coefficients, normalized depths, bbox (16 f32 / face)
# ----------------------------------------------------------------------------
def build_face_table(proj, face):
    # proj: (B, 3, V) = [px, py, z_cam];  face: (F, 3) int32
    B = proj.shape[0]
    F = face.shape[0]
    tf = 128 if F >= 128 else _round_up(F, 8)    # faces per DMA chunk
    nchunks = (F + tf - 1) // tf

    px, py, z = proj[:, 0, :], proj[:, 1, :], proj[:, 2, :]
    i0, i1, i2 = face[:, 0], face[:, 1], face[:, 2]
    ax, ay, az = px[:, i0], py[:, i0], z[:, i0]
    bx, by, bz = px[:, i1], py[:, i1], z[:, i1]
    cx, cy, cz = px[:, i2], py[:, i2], z[:, i2]

    # w_i(px, py) = A_i*px + B_i*py + C_i  (same values as the original edge fns)
    A0 = by - cy; B0 = cx - bx; C0 = bx * cy - cx * by
    A1 = cy - ay; B1 = ax - cx; C1 = cx * ay - ax * cy
    A2 = ay - by; B2 = bx - ax; C2 = ax * by - bx * ay

    area = (bx - ax) * (cy - ay) - (by - ay) * (cx - ax)
    area_ok = jnp.abs(area) > 1e-9
    inv_area = jnp.where(area_ok, 1.0 / jnp.where(area_ok, area, 1.0), 0.0)
    azp, bzp, czp = az * inv_area, bz * inv_area, cz * inv_area

    front = (az > 0.0) & (bz > 0.0) & (cz > 0.0)
    valid = area_ok & front

    big = jnp.float32(1e30)
    xmin = jnp.where(valid, jnp.minimum(jnp.minimum(ax, bx), cx), big)
    xmax = jnp.where(valid, jnp.maximum(jnp.maximum(ax, bx), cx), -big)
    ymin = jnp.where(valid, jnp.minimum(jnp.minimum(ay, by), cy), big)
    ymax = jnp.where(valid, jnp.maximum(jnp.maximum(ay, by), cy), -big)

    coef = jnp.stack([A0, B0, C0, A1, B1, C1, A2, B2, C2,
                      azp, bzp, czp, xmin, xmax, ymin, ymax], axis=-1)  # (B,F,16)

    Fp = nchunks * tf
    if Fp > F:                                   # padded faces: empty bbox -> culled
        pad_row = jnp.array([0.0] * 12 + [1e30, -1e30, 1e30, -1e30], jnp.float32)
        coef = jnp.concatenate(
            [coef, jnp.broadcast_to(pad_row, (B, Fp - F, 16))], axis=1)
    return coef.astype(jnp.float32), nchunks, tf


# ----------------------------------------------------------------------------
# Kernel 2: z-buffer rasterization with bbox culling + streamed face chunks
# ----------------------------------------------------------------------------
def raster_kernel(coef_hbm, out_ref, buf, sem, *, nchunks, tf, th, tw):
    # coef_hbm : (B*nchunks, tf*16) f32 in HBM (pl.ANY)
    # out_ref  : (1, 1, th, tw) depth tile (accumulated in place)
    # buf      : (2, tf*16) f32 SMEM double buffer
    # sem      : DMA semaphores (2,)
    b = pl.program_id(0)
    y0 = (pl.program_id(1) * th).astype(jnp.float32)
    x0 = (pl.program_id(2) * tw).astype(jnp.float32)
    ppy = y0 + jax.lax.broadcasted_iota(jnp.float32, (th, tw), 0) + 0.5
    ppx = x0 + jax.lax.broadcasted_iota(jnp.float32, (th, tw), 1) + 0.5
    tile_xmin = x0 + 0.5
    tile_xmax = x0 + (tw - 0.5)
    tile_ymin = y0 + 0.5
    tile_ymax = y0 + (th - 0.5)

    # Prefetch chunk 0 into slot 0 while we initialize the z-buffer tile.
    pltpu.make_async_copy(coef_hbm.at[b * nchunks], buf.at[0], sem.at[0]).start()
    out_ref[0, 0] = jnp.full((th, tw), -1.0, dtype=jnp.float32)

    def process_face(slot, f):
        base = f * 16
        xmin = buf[slot, base + 12]
        xmax = buf[slot, base + 13]
        ymin = buf[slot, base + 14]
        ymax = buf[slot, base + 15]
        overlap = ((xmin <= tile_xmax) & (xmax >= tile_xmin) &
                   (ymin <= tile_ymax) & (ymax >= tile_ymin))

        @pl.when(overlap)           # scalar bbox test skips all vector work
        def _():
            a0 = buf[slot, base + 0]
            b0 = buf[slot, base + 1]
            c0 = buf[slot, base + 2]
            a1 = buf[slot, base + 3]
            b1 = buf[slot, base + 4]
            c1 = buf[slot, base + 5]
            a2 = buf[slot, base + 6]
            b2 = buf[slot, base + 7]
            c2 = buf[slot, base + 8]
            azp = buf[slot, base + 9]
            bzp = buf[slot, base + 10]
            czp = buf[slot, base + 11]
            w0 = a0 * ppx + b0 * ppy + c0
            w1 = a1 * ppx + b1 * ppy + c1
            w2 = a2 * ppx + b2 * ppy + c2
            inside = (((w0 >= 0.0) & (w1 >= 0.0) & (w2 >= 0.0)) |
                      ((w0 <= 0.0) & (w1 <= 0.0) & (w2 <= 0.0)))
            zpix = w0 * azp + w1 * bzp + w2 * czp
            zb = out_ref[0, 0]
            hit = inside & ((zb < 0.0) | (zpix < zb))
            out_ref[0, 0] = jnp.where(hit, zpix, zb)

    UNROLL = 4   # tf is a multiple of 8, so a multiple of UNROLL

    def chunk_body(c, carry):
        slot = c & 1
        pltpu.make_async_copy(coef_hbm.at[b * nchunks + c], buf.at[slot],
                              sem.at[slot]).wait()

        @pl.when(c + 1 < nchunks)   # prefetch next face chunk into the other slot
        def _():
            pltpu.make_async_copy(coef_hbm.at[b * nchunks + c + 1],
                                  buf.at[1 - slot], sem.at[1 - slot]).start()

        def face_body(i, inner):
            f = i * UNROLL
            for u in range(UNROLL):         # manual partial unroll
                process_face(slot, f + u)
            return inner

        jax.lax.fori_loop(0, tf // UNROLL, face_body, 0)
        return carry

    jax.lax.fori_loop(0, nchunks, chunk_body, 0)


def rasterize(coef, B, nchunks, tf, Hp, Wp):
    th = _pick_tile(Hp, (64, 32, 16, 8))
    tw = _pick_tile(Wp, (512, 256, 128))
    coef2d = coef.reshape(B * nchunks, tf * 16)
    kernel = functools.partial(raster_kernel, nchunks=nchunks, tf=tf, th=th, tw=tw)
    return pl.pallas_call(
        kernel,
        out_shape=jax.ShapeDtypeStruct((B, 1, Hp, Wp), jnp.float32),
        grid=(B, Hp // th, Wp // tw),
        in_specs=[pl.BlockSpec(memory_space=pl.ANY)],         # face table stays in HBM
        out_specs=pl.BlockSpec((1, 1, th, tw), lambda b, i, j: (b, 0, i, j)),
        scratch_shapes=[
            pltpu.SMEM((2, tf * 16), jnp.float32),            # double-buffered chunk
            pltpu.SemaphoreType.DMA((2,)),
        ],
        compiler_params=pltpu.CompilerParams(
            dimension_semantics=("parallel", "parallel", "parallel")),
    )(coef2d)


# ----------------------------------------------------------------------------
# Module-equivalent wrapper
# ----------------------------------------------------------------------------
def depthmap_renderer(mesh, face, cam_param, render_shape, set_faces_per_bin=False):
    B, V, _ = mesh.shape
    H, W = render_shape

    R = cam_param.get('R')
    if R is None:
        R = jnp.tile(jnp.eye(3, dtype=jnp.float32)[None], (B, 1, 1))
    t = cam_param.get('t')
    if t is None:
        t = jnp.zeros((B, 3), dtype=jnp.float32)
    cam = jnp.concatenate([cam_param['focal'], cam_param['princpt']], axis=-1)

    # Pallas kernel 1: lane-dense R @ v + t + pinhole projection -> (B, 3, V)
    proj = vertex_transform(mesh.astype(jnp.float32), R.astype(jnp.float32),
                            t.astype(jnp.float32), cam.astype(jnp.float32))

    # XLA glue: per-face edge coefficients / normalized depths / bbox
    coef, nchunks, tf = build_face_table(proj, face)

    # Pallas kernel 2: z-buffer rasterization at lane-aligned padded resolution
    Hp, Wp = _round_up(H, 8), _round_up(W, 128)
    depth = rasterize(coef, B, nchunks, tf, Hp, Wp)
    return depth[:, :, :H, :W]                      # (B, 1, H, W), background = -1


if __name__ == "__main__":
    key = jax.random.PRNGKey(0)
    k_xy, k_z, k_face = jax.random.split(key, 3)

    B, V, F = 2, 12, 20
    H, W = 16, 16

    xy = jax.random.uniform(k_xy, (B, V, 2), minval=-1.0, maxval=1.0)
    z = jax.random.uniform(k_z, (B, V, 1), minval=2.0, maxval=4.0)
    mesh = jnp.concatenate([xy, z], axis=-1).astype(jnp.float32)
    face = jax.random.randint(k_face, (F, 3), 0, V, dtype=jnp.int32)

    cam_param = {
        'R': jnp.tile(jnp.eye(3, dtype=jnp.float32)[None], (B, 1, 1)),
        't': jnp.zeros((B, 3), dtype=jnp.float32),
        'focal': jnp.full((B, 2), 16.0, dtype=jnp.float32),
        'princpt': jnp.full((B, 2), 8.0, dtype=jnp.float32),
    }

    depthmap = depthmap_renderer(mesh, face, cam_param, (H, W))
    depthmap = jax.block_until_ready(depthmap)

    assert depthmap.shape == (B, 1, H, W), depthmap.shape
    assert bool(jnp.all(jnp.isfinite(depthmap)))
    print("KERNEL_OK")
</pallas_src>

<mosaic_0001>
module attributes {stable_mosaic.version = 11 : i64} {
  func.func @vertex_kernel(%arg0: i32, %arg1: memref<2x16xf32, #tpu.memory_space<smem>>, %arg2: memref<1x3x128xf32, #tpu.memory_space<vmem>>, %arg3: memref<1x3x128xf32, #tpu.memory_space<vmem>>) attributes {dimension_semantics = [#tpu.dimension_semantics<parallel>], iteration_bounds = array<i64: 2>, scalar_prefetch = 0 : i64, scratch_operands = 0 : i64, tpu.core_type = #tpu.core_type<tc>, window_params = [{transform_indices = @transform_0, window_bounds = array<i64: 2, 16>}, {transform_indices = @transform_1, window_bounds = array<i64: 1, 3, 128>}, {transform_indices = @transform_2, window_bounds = array<i64: 1, 3, 128>}]} {
    %c0 = arith.constant 0 : index
    %c0_0 = arith.constant 0 : index
    %c0_1 = arith.constant 0 : index
    %0 = vector.load %arg2[%c0, %c0_0, %c0_1] : memref<1x3x128xf32, #tpu.memory_space<vmem>>, vector<1x1x128xf32>
    %1 = vector.shape_cast %0 : vector<1x1x128xf32> to vector<1x128xf32>
    %c0_2 = arith.constant 0 : index
    %c1 = arith.constant 1 : index
    %c0_3 = arith.constant 0 : index
    %2 = vector.load %arg2[%c0_2, %c1, %c0_3] : memref<1x3x128xf32, #tpu.memory_space<vmem>>, vector<1x1x128xf32>
    %3 = vector.shape_cast %2 : vector<1x1x128xf32> to vector<1x128xf32>
    %c0_4 = arith.constant 0 : index
    %c2 = arith.constant 2 : index
    %c0_5 = arith.constant 0 : index
    %4 = vector.load %arg2[%c0_4, %c2, %c0_5] : memref<1x3x128xf32, #tpu.memory_space<vmem>>, vector<1x1x128xf32>
    %5 = vector.shape_cast %4 : vector<1x1x128xf32> to vector<1x128xf32>
    %6 = arith.index_cast %arg0 : i32 to index
    %c0_6 = arith.constant 0 : index
    %7 = memref.load %arg1[%6, %c0_6] : memref<2x16xf32, #tpu.memory_space<smem>>
    %8 = arith.index_cast %arg0 : i32 to index
    %c1_7 = arith.constant 1 : index
    %9 = memref.load %arg1[%8, %c1_7] : memref<2x16xf32, #tpu.memory_space<smem>>
    %10 = arith.index_cast %arg0 : i32 to index
    %c2_8 = arith.constant 2 : index
    %11 = memref.load %arg1[%10, %c2_8] : memref<2x16xf32, #tpu.memory_space<smem>>
    %12 = arith.index_cast %arg0 : i32 to index
    %c3 = arith.constant 3 : index
    %13 = memref.load %arg1[%12, %c3] : memref<2x16xf32, #tpu.memory_space<smem>>
    %14 = arith.index_cast %arg0 : i32 to index
    %c4 = arith.constant 4 : index
    %15 = memref.load %arg1[%14, %c4] : memref<2x16xf32, #tpu.memory_space<smem>>
    %16 = arith.index_cast %arg0 : i32 to index
    %c5 = arith.constant 5 : index
    %17 = memref.load %arg1[%16, %c5] : memref<2x16xf32, #tpu.memory_space<smem>>
    %18 = arith.index_cast %arg0 : i32 to index
    %c6 = arith.constant 6 : index
    %19 = memref.load %arg1[%18, %c6] : memref<2x16xf32, #tpu.memory_space<smem>>
    %20 = arith.index_cast %arg0 : i32 to index
    %c7 = arith.constant 7 : index
    %21 = memref.load %arg1[%20, %c7] : memref<2x16xf32, #tpu.memory_space<smem>>
    %22 = arith.index_cast %arg0 : i32 to index
    %c8 = arith.constant 8 : index
    %23 = memref.load %arg1[%22, %c8] : memref<2x16xf32, #tpu.memory_space<smem>>
    %24 = arith.index_cast %arg0 : i32 to index
    %c9 = arith.constant 9 : index
    %25 = memref.load %arg1[%24, %c9] : memref<2x16xf32, #tpu.memory_space<smem>>
    %26 = arith.index_cast %arg0 : i32 to index
    %c10 = arith.constant 10 : index
    %27 = memref.load %arg1[%26, %c10] : memref<2x16xf32, #tpu.memory_space<smem>>
    %28 = arith.index_cast %arg0 : i32 to index
    %c11 = arith.constant 11 : index
    %29 = memref.load %arg1[%28, %c11] : memref<2x16xf32, #tpu.memory_space<smem>>
    %30 = arith.index_cast %arg0 : i32 to index
    %c12 = arith.constant 12 : index
    %31 = memref.load %arg1[%30, %c12] : memref<2x16xf32, #tpu.memory_space<smem>>
    %32 = arith.index_cast %arg0 : i32 to index
    %c13 = arith.constant 13 : index
    %33 = memref.load %arg1[%32, %c13] : memref<2x16xf32, #tpu.memory_space<smem>>
    %34 = arith.index_cast %arg0 : i32 to index
    %c14 = arith.constant 14 : index
    %35 = memref.load %arg1[%34, %c14] : memref<2x16xf32, #tpu.memory_space<smem>>
    %36 = arith.index_cast %arg0 : i32 to index
    %c15 = arith.constant 15 : index
    %37 = memref.load %arg1[%36, %c15] : memref<2x16xf32, #tpu.memory_space<smem>>
    %38 = vector.broadcast %7 : f32 to vector<1x128xf32>
    %39 = arith.mulf %38, %1 : vector<1x128xf32>
    %40 = vector.broadcast %9 : f32 to vector<1x128xf32>
    %41 = arith.mulf %40, %3 : vector<1x128xf32>
    %42 = arith.addf %39, %41 : vector<1x128xf32>
    %43 = vector.broadcast %11 : f32 to vector<1x128xf32>
    %44 = arith.mulf %43, %5 : vector<1x128xf32>
    %45 = arith.addf %42, %44 : vector<1x128xf32>
    %46 = vector.broadcast %25 : f32 to vector<1x128xf32>
    %47 = arith.addf %45, %46 : vector<1x128xf32>
    %48 = vector.broadcast %13 : f32 to vector<1x128xf32>
    %49 = arith.mulf %48, %1 : vector<1x128xf32>
    %50 = vector.broadcast %15 : f32 to vector<1x128xf32>
    %51 = arith.mulf %50, %3 : vector<1x128xf32>
    %52 = arith.addf %49, %51 : vector<1x128xf32>
    %53 = vector.broadcast %17 : f32 to vector<1x128xf32>
    %54 = arith.mulf %53, %5 : vector<1x128xf32>
    %55 = arith.addf %52, %54 : vector<1x128xf32>
    %56 = vector.broadcast %27 : f32 to vector<1x128xf32>
    %57 = arith.addf %55, %56 : vector<1x128xf32>
    %58 = vector.broadcast %19 : f32 to vector<1x128xf32>
    %59 = arith.mulf %58, %1 : vector<1x128xf32>
    %60 = vector.broadcast %21 : f32 to vector<1x128xf32>
    %61 = arith.mulf %60, %3 : vector<1x128xf32>
    %62 = arith.addf %59, %61 : vector<1x128xf32>
    %63 = vector.broadcast %23 : f32 to vector<1x128xf32>
    %64 = arith.mulf %63, %5 : vector<1x128xf32>
    %65 = arith.addf %62, %64 : vector<1x128xf32>
    %66 = vector.broadcast %29 : f32 to vector<1x128xf32>
    %67 = arith.addf %65, %66 : vector<1x128xf32>
    %68 = math.absf %67 : vector<1x128xf32>
    %cst = arith.constant 9.99999993E-9 : f32
    %69 = vector.broadcast %cst : f32 to vector<1x128xf32>
    %70 = arith.cmpf olt, %68, %69 : vector<1x128xf32>
    %cst_9 = arith.constant 9.99999993E-9 : f32
    %71 = vector.broadcast %cst_9 : f32 to vector<1x128xf32>
    %72 = arith.select %70, %71, %67 : vector<1x128xi1>, vector<1x128xf32>
    %73 = tpu.reciprocal %72 : vector<1x128xf32> -> vector<1x128xf32>
    %74 = vector.broadcast %31 : f32 to vector<1x128xf32>
    %75 = arith.mulf %74, %47 : vector<1x128xf32>
    %76 = arith.mulf %75, %73 : vector<1x128xf32>
    %77 = vector.broadcast %35 : f32 to vector<1x128xf32>
    %78 = arith.addf %76, %77 : vector<1x128xf32>
    %c0_10 = arith.constant 0 : index
    %c0_11 = arith.constant 0 : index
    %c0_12 = arith.constant 0 : index
    %79 = vector.load %arg3[%c0_10, %c0_11, %c0_12] : memref<1x3x128xf32, #tpu.memory_space<vmem>>, vector<1x1x128xf32>
    %80 = vector.shape_cast %79 : vector<1x1x128xf32> to vector<1x128xf32>
    %81 = vector.shape_cast %78 : vector<1x128xf32> to vector<1x1x128xf32>
    tpu.vector_store %arg3[%c0_10, %c0_11, %c0_12], %81 {strides = array<i32>} : memref<1x3x128xf32, #tpu.memory_space<vmem>>, vector<1x1x128xf32>,
    %82 = vector.broadcast %33 : f32 to vector<1x128xf32>
    %83 = arith.mulf %82, %57 : vector<1x128xf32>
    %84 = arith.mulf %83, %73 : vector<1x128xf32>
    %85 = vector.broadcast %37 : f32 to vector<1x128xf32>
    %86 = arith.addf %84, %85 : vector<1x128xf32>
    %c0_13 = arith.constant 0 : index
    %c1_14 = arith.constant 1 : index
    %c0_15 = arith.constant 0 : index
    %87 = vector.load %arg3[%c0_13, %c1_14, %c0_15] : memref<1x3x128xf32, #tpu.memory_space<vmem>>, vector<1x1x128xf32>
    %88 = vector.shape_cast %87 : vector<1x1x128xf32> to vector<1x128xf32>
    %89 = vector.shape_cast %86 : vector<1x128xf32> to vector<1x1x128xf32>
    tpu.vector_store %arg3[%c0_13, %c1_14, %c0_15], %89 {strides = array<i32>} : memref<1x3x128xf32, #tpu.memory_space<vmem>>, vector<1x1x128xf32>,
    %c0_16 = arith.constant 0 : index
    %c2_17 = arith.constant 2 : index
    %c0_18 = arith.constant 0 : index
    %90 = vector.load %arg3[%c0_16, %c2_17, %c0_18] : memref<1x3x128xf32, #tpu.memory_space<vmem>>, vector<1x1x128xf32>
    %91 = vector.shape_cast %90 : vector<1x1x128xf32> to vector<1x128xf32>
    %92 = vector.shape_cast %67 : vector<1x128xf32> to vector<1x1x128xf32>
    tpu.vector_store %arg3[%c0_16, %c2_17, %c0_18], %92 {strides = array<i32>} : memref<1x3x128xf32, #tpu.memory_space<vmem>>, vector<1x1x128xf32>,
    return
  }
  func.func @transform_0(%arg0: i32) -> (i32, i32) {
    %c0_i32 = arith.constant 0 : i32
    %c0_i32_0 = arith.constant 0 : i32
    %c0_i32_1 = arith.constant 0 : i32
    return %c0_i32, %c0_i32_0 : i32, i32
  }
  func.func @transform_1(%arg0: i32) -> (i32, i32, i32) {
    %c0_i32 = arith.constant 0 : i32
    %c0_i32_0 = arith.constant 0 : i32
    %c0_i32_1 = arith.constant 0 : i32
    return %arg0, %c0_i32, %c0_i32_0 : i32, i32, i32
  }
  func.func @transform_2(%arg0: i32) -> (i32, i32, i32) {
    %c0_i32 = arith.constant 0 : i32
    %c0_i32_0 = arith.constant 0 : i32
    %c0_i32_1 = arith.constant 0 : i32
    return %arg0, %c0_i32, %c0_i32_0 : i32, i32, i32
  }
}

</mosaic_0001>

<llo_original>
// kernel: tpu_custom_call.1
$region0: #{tpu_custom_call.1}
  #allocation0 [shape = 'u32[]', space=smem, size = 0x4, offset = 0x4, fixed_abs, tag = 'smem constant byte address 0x4 - core index']
  #allocation1 [shape = 'u32[144,128]{1,0:T(1,128)}', space=vmem, size = 0x12000, scoped, tag = 'internal scratch']
  %s0 = inlined_call_operand.vmem [shape: f32[2,16], index: 0, kind: input, shape index: {}]
  %s1 = inlined_call_operand.vmem [shape: f32[2,3,128], index: 1, kind: input, shape index: {}]
  %s2 = inlined_call_operand.vmem [shape: f32[2,3,128], index: 2, kind: output, shape index: {}]
  %s3 = sld [smem:[#allocation0]]
  $region45: #{tpu_custom_call.1} parent=0
    _
  %s5 = ssub.s32 1, %s3
  %s6 = scalar_select 0, %s5, %s3
  $region1: #{tpu_custom_call.1} parent=0
    #allocation2 [shape = 'u8[1024]{0}', space=smem, size = 0x400, scoped, tag = 'input window, operand 0, single buffered']
    #allocation3 [shape = 's32[2]{0}', space=sflag, size = 0x8, scoped, tag = 'scoped memory for tpu_custom_call.1']
    %7 = vsyncpa [#allocation3], 0
    loop: start=0, step=1, limit=4
    $region2: #{tpu_custom_call.1} parent=1 // loop_pre_header
      _
    $region3: #{tpu_custom_call.1} parent=1 // loop_header
      %s9 = sphi 0, %s13
      %p10 = scmp.ge.s32.totalorder %s9, 4
      %s17 = sphi 0, %s17
      %s19 = sphi 0, %s17
      %s20 = sphi 0, %s19
      %s34 = sphi 0, %s20
      %s40 = sphi 0, %s42
      %s43 = sphi 0, %s40
      %s44 = sphi 0, %s43
      %s60 = sphi 0, %s44
      %s66 = sphi 0, %s68
      %s69 = sphi 0, %s66
      %s70 = sphi 0, %s69
      %s86 = sphi 0, %s70
    $region4: #{tpu_custom_call.1} parent=1 // loop_header_branch
      %12 = sbr.rel (%p10) target = $region8
    $region5: #{tpu_custom_call.1} parent=1 // loop_body
      %s14 = ssub.s32 %s9, 1
      %s15 = ssub.s32 %s9, 2
      %s16 = sadd.s32 %s9, 1
      %s18 = sadd.s32 %s17, 1
      %p21 = scmp.eq.s32.totalorder %s9, 1
      %p22 = scmp.ne.s32.totalorder %s17, %s19
      %p23 = scmp.eq.s32.totalorder %s9, 0
      %p24 = por %p22, %p23
      %p25 = scmp.ne.s32.totalorder %s17, %s19
      %p26 = scmp.eq.s32.totalorder %s14, 1
      %p27 = por %p25, %p26
      %p28 = scmp.ne.s32.totalorder %s19, %s20
      %p29 = scmp.eq.s32.totalorder %s14, 0
      %p30 = por %p28, %p29
      %p31 = scmp.ne.s32.totalorder %s19, %s20
      %p32 = scmp.eq.s32.totalorder %s15, 1
      %p33 = por %p31, %p32
      %p35 = scmp.ne.s32.totalorder %s20, %s34
      %p36 = scmp.eq.s32.totalorder %s15, 0
      %p37 = por %p35, %p36
      %s38 = ssub.s32 %s9, %s16
      %p39 = scmp.eq.s32.totalorder %s38, 0
      %s41 = sadd.s32 %s40, 1
      %s42 = scalar_select %p39, %s40, %s41
      %p45 = pneg %p39
      %p46 = scmp.eq.s32.totalorder %s9, 1
      %p47 = por %p45, %p46
      %p48 = scmp.ne.s32.totalorder %s40, %s43
      %p49 = scmp.eq.s32.totalorder %s9, 0
      %p50 = por %p48, %p49
      %p51 = scmp.ne.s32.totalorder %s40, %s43
      %p52 = scmp.eq.s32.totalorder %s14, 1
      %p53 = por %p51, %p52
      %p54 = scmp.ne.s32.totalorder %s43, %s44
      %p55 = scmp.eq.s32.totalorder %s14, 0
      %p56 = por %p54, %p55
      %p57 = scmp.ne.s32.totalorder %s43, %s44
      %p58 = scmp.eq.s32.totalorder %s15, 1
      %p59 = por %p57, %p58
      %p61 = scmp.ne.s32.totalorder %s44, %s60
      %p62 = scmp.eq.s32.totalorder %s15, 0
      %p63 = por %p61, %p62
      %s64 = ssub.s32 %s9, %s16
      %p65 = scmp.eq.s32.totalorder %s64, 0
      %s67 = sadd.s32 %s66, 1
      %s68 = scalar_select %p65, %s66, %s67
      %p71 = pneg %p65
      %p72 = scmp.eq.s32.totalorder %s9, 1
      %p73 = por %p71, %p72
      %p74 = scmp.ne.s32.totalorder %s66, %s69
      %p75 = scmp.eq.s32.totalorder %s9, 0
      %p76 = por %p74, %p75
      %p77 = scmp.ne.s32.totalorder %s66, %s69
      %p78 = scmp.eq.s32.totalorder %s14, 1
      %p79 = por %p77, %p78
      %p80 = scmp.ne.s32.totalorder %s69, %s70
      %p81 = scmp.eq.s32.totalorder %s14, 0
      %p82 = por %p80, %p81
      %p83 = scmp.ne.s32.totalorder %s69, %s70
      %p84 = scmp.eq.s32.totalorder %s15, 1
      %p85 = por %p83, %p84
      %p87 = scmp.ne.s32.totalorder %s70, %s86
      %p88 = scmp.eq.s32.totalorder %s15, 0
      %p89 = por %p87, %p88
      %p90 = scmp.le.s32.totalorder 1, %s9
      %p91 = scmp.lt.s32.totalorder %s9, 3
      %p92 = pnand %p90, %p91
      %p93 = pneg %p92
      // Predicated region
      $region9: #{tpu_custom_call.1} parent=5 // pred_check
        _
      $region10: #{tpu_custom_call.1} parent=5 // pred_check_branch
        %95 = sbr.rel (%p92) target = $region12
      $region11: #{tpu_custom_call.1} parent=5 // pred_region
        %s96 = ssub.s32 %s9, 1
        // Predicated region
        $region13: #{tpu_custom_call.1} parent=11 // pred_check
          %p97 = pneg %p30
        $region14: #{tpu_custom_call.1} parent=11 // pred_check_branch
          %99 = sbr.rel (%p97) target = $region16
        $region15: #{tpu_custom_call.1} parent=11 // pred_region
          %s101 = ssub.s32 32, 32
          %102 = vsyncadd [#allocation3], %s101
          %s104 = sshll.u32 %s0, 4
          %s105 = int_to_ptr.vmem [resolvable:$true] %s104
          %107 = dma.vmem_to_smem %s105, 32, [#allocation2], [#allocation3]
        $region16: #{tpu_custom_call.1} parent=11 // pred_fallthru
          _
      $region12: #{tpu_custom_call.1} parent=5 // pred_fallthru
        _
      %p108 = scmp.lt.s32.totalorder %s9, 2
      // Predicated region
      $region17: #{tpu_custom_call.1} parent=5 // pred_check
        %p109 = pneg %p108
      $region18: #{tpu_custom_call.1} parent=5 // pred_check_branch
        %111 = sbr.rel (%p109) target = $region20
      $region19: #{tpu_custom_call.1} parent=5 // pred_region
        // Predicated region
        $region21: #{tpu_custom_call.1} parent=19 // pred_check
          %p112 = pneg %p50
        $region22: #{tpu_custom_call.1} parent=19 // pred_check_branch
          %114 = sbr.rel (%p112) target = $region24
        $region23: #{tpu_custom_call.1} parent=19 // pred_region
          %p115 = scmp.lt.s32.totalorder %s9, 1
          %s116 = scalar_select %p115, %s9, 1
          %s117 = smul.addr %s116, 4
          %s118 = scalar_lea.vmem %s1, %s117
        $region24: #{tpu_custom_call.1} parent=19 // pred_fallthru
          _
      $region20: #{tpu_custom_call.1} parent=5 // pred_fallthru
        _
      %p119 = scmp.le.s32.totalorder 1, %s9
      %p120 = scmp.lt.s32.totalorder %s9, 3
      %p121 = pnand %p119, %p120
      %p122 = pneg %p121
      // Predicated region
      $region25: #{tpu_custom_call.1} parent=5 // pred_check
        _
      $region26: #{tpu_custom_call.1} parent=5 // pred_check_branch
        %124 = sbr.rel (%p121) target = $region28
      $region27: #{tpu_custom_call.1} parent=5 // pred_region
        %s125 = ssub.s32 %s9, 1
        // Predicated region
        $region29: #{tpu_custom_call.1} parent=27 // pred_check
          %p126 = pneg %p30
        $region30: #{tpu_custom_call.1} parent=27 // pred_check_branch
          %128 = sbr.rel (%p126) target = $region32
        $region31: #{tpu_custom_call.1} parent=27 // pred_region
          %129 = dma.done [#allocation3], 32
        $region32: #{tpu_custom_call.1} parent=27 // pred_fallthru
          _
        %130 = sfence
        %p131 = pneg %p30
        %p132 = pneg %p27
        %p133 = scmp.lt.s32.totalorder %s14, 1
        %s134 = scalar_select %p133, %s14, 1
        %s135 = smul.addr %s134, 4
        %s136 = scalar_lea.vmem %s1, %s135
        %p137 = pneg %p56
        %p138 = pneg %p53
        %p139 = pneg %p82
        %p140 = pneg %p79
        %p141 = scmp.lt.s32.totalorder %s14, 1
        %s142 = scalar_select %p141, %s14, 1
        %s143 = smul.addr %s142, 4
        %s144 = scalar_lea.vmem %s2, %s143
        %p145 = scmp.lt.s32.totalorder %s14, 1
        %s146 = scalar_select %p145, %s14, 1
        %s147 = smul.addr %s146, 4
        %s148 = scalar_lea.vmem %s1, %s147
        %p149 = scmp.lt.s32.totalorder %s14, 1
        %s150 = scalar_select %p149, %s14, 1
        %s151 = smul.addr %s150, 4
        %s152 = scalar_lea.vmem %s2, %s151
        %v153 = vld [vmem:[%s148] sm:$0x1]
        %v154 = vld [vmem:[%s148 + $0x1] sm:$0x1]
        %v155 = vld [vmem:[%s148 + $0x2] sm:$0x1]
        %s156 = smul.u32 %s14, 128
        %s157 = sld [smem:[#allocation2 + %s156]]
        %s158 = sadd.s32 %s156, 1
        %s159 = sld [smem:[#allocation2 + %s158]]
        %s160 = sadd.s32 %s156, 2
        %s161 = sld [smem:[#allocation2 + %s160]]
        %s162 = sadd.s32 %s156, 3
        %s163 = sld [smem:[#allocation2 + %s162]]
        %s164 = sadd.s32 %s156, 4
        %s165 = sld [smem:[#allocation2 + %s164]]
        %s166 = sadd.s32 %s156, 5
        %s167 = sld [smem:[#allocation2 + %s166]]
        %s168 = sadd.s32 %s156, 6
        %s169 = sld [smem:[#allocation2 + %s168]]
        %s170 = sadd.s32 %s156, 7
        %s171 = sld [smem:[#allocation2 + %s170]]
        %s172 = sadd.s32 %s156, 8
        %s173 = sld [smem:[#allocation2 + %s172]]
        %s174 = sadd.s32 %s156, 9
        %s175 = sld [smem:[#allocation2 + %s174]]
        %s176 = sadd.s32 %s156, 10
        %s177 = sld [smem:[#allocation2 + %s176]]
        %s178 = sadd.s32 %s156, 11
        %s179 = sld [smem:[#allocation2 + %s178]]
        %s180 = sadd.s32 %s156, 12
        %s181 = sld [smem:[#allocation2 + %s180]]
        %s182 = sadd.s32 %s156, 13
        %s183 = sld [smem:[#allocation2 + %s182]]
        %s184 = sadd.s32 %s156, 14
        %s185 = sld [smem:[#allocation2 + %s184]]
        %s186 = sadd.s32 %s156, 15
        %s187 = sld [smem:[#allocation2 + %s186]]
        %v188 = vstv %s157
        %v189 = vmul.f32 %v188, %v153
        %v190 = vstv %s159
        %v191 = vmul.f32 %v190, %v154
        %v192 = vadd.f32 %v189, %v191
        %v193 = vstv %s161
        %v194 = vmul.f32 %v193, %v155
        %v195 = vadd.f32 %v192, %v194
        %v196 = vstv %s175
        %v197 = vadd.f32 %v195, %v196
        %v198 = vstv %s163
        %v199 = vmul.f32 %v198, %v153
        %v200 = vstv %s165
        %v201 = vmul.f32 %v200, %v154
        %v202 = vadd.f32 %v199, %v201
        %v203 = vstv %s167
        %v204 = vmul.f32 %v203, %v155
        %v205 = vadd.f32 %v202, %v204
        %v206 = vstv %s177
        %v207 = vadd.f32 %v205, %v206
        %v208 = vstv %s169
        %v209 = vmul.f32 %v208, %v153
        %v210 = vstv %s171
        %v211 = vmul.f32 %v210, %v154
        %v212 = vadd.f32 %v209, %v211
        %v213 = vstv %s173
        %v214 = vmul.f32 %v213, %v155
        %v215 = vadd.f32 %v212, %v214
        %v216 = vstv %s179
        %v217 = vadd.f32 %v215, %v216
        %v218 = vand.u32 2147483647, %v217
        %vm219 = vcmp.lt.f32.partialorder %v218, 1e-08
        %v220 = vsel %vm219, 1e-08, %v217
        %v221 = vrcp.pop %v220
        %v222 = vstv %s181
        %v223 = vmul.f32 %v222, %v197
        %v224 = vmul.f32 %v223, %v221
        %v225 = vstv %s185
        %v226 = vadd.f32 %v224, %v225
        %227 = vst [vmem:[%s152] sm:$0x1] %v226
        %v228 = vstv %s183
        %v229 = vmul.f32 %v228, %v207
        %v230 = vmul.f32 %v229, %v221
        %v231 = vstv %s187
        %v232 = vadd.f32 %v230, %v231
        %233 = vst [vmem:[%s152 + $0x1] sm:$0x1] %v232
        %234 = vst [vmem:[%s152 + $0x2] sm:$0x1] %v217
        %p235 = scmp.lt.s32.totalorder %s14, 1
        %s236 = scalar_select %p235, %s14, 1
        %s237 = smul.addr %s236, 4
        %s238 = scalar_lea.vmem %s2, %s237
        // Predicated region
        $region33: #{tpu_custom_call.1} parent=27 // pred_check
          %p239 = pneg %p79
        $region34: #{tpu_custom_call.1} parent=27 // pred_check_branch
          %241 = sbr.rel (%p239) target = $region36
        $region35: #{tpu_custom_call.1} parent=27 // pred_region
          _
        $region36: #{tpu_custom_call.1} parent=27 // pred_fallthru
          _
      $region28: #{tpu_custom_call.1} parent=5 // pred_fallthru
        _
      %p242 = scmp.le.s32.totalorder 2, %s9
      // Predicated region
      $region37: #{tpu_custom_call.1} parent=5 // pred_check
        %p243 = pneg %p242
      $region38: #{tpu_custom_call.1} parent=5 // pred_check_branch
        %245 = sbr.rel (%p243) target = $region40
      $region39: #{tpu_custom_call.1} parent=5 // pred_region
        %s246 = ssub.s32 %s9, 2
        // Predicated region
        $region41: #{tpu_custom_call.1} parent=39 // pred_check
          %p247 = pneg %p85
        $region42: #{tpu_custom_call.1} parent=39 // pred_check_branch
          %249 = sbr.rel (%p247) target = $region44
        $region43: #{tpu_custom_call.1} parent=39 // pred_region
          %p250 = scmp.lt.s32.totalorder %s15, 1
          %s251 = scalar_select %p250, %s15, 1
          %s252 = smul.addr %s251, 4
          %s253 = scalar_lea.vmem %s2, %s252
        $region44: #{tpu_custom_call.1} parent=39 // pred_fallthru
          _
      $region40: #{tpu_custom_call.1} parent=5 // pred_fallthru
        _
    $region6: #{tpu_custom_call.1} parent=1 // loop_footer
      %s13 = sadd.s32 1, %s9
    $region7: #{tpu_custom_call.1} parent=1 // loop_footer_branch
      %8 = sbr.rel target = $region3
    $region8: #{tpu_custom_call.1} parent=1 // loop_exit
      _
    %254 = vsyncpa [#allocation3], 1
    %s255 = scalar_lea.sflag [#allocation3], 1
    %256 = vsyncpa %s255, 1

</llo_original>
